<compile_context>
chip_gen: v6e
topology: v6e:2x2x1
jax: 0.10.0
libtpu: 0.0.40
codegen_flags: <defaults>
</compile_context>

<pallas_src>
import functools

import jax
import jax.numpy as jnp
from jax import lax
from jax.experimental import pallas as pl
from jax.experimental.pallas import tpu as pltpu


# ----------------------------------------------------------------------------
# hardware helpers
# ----------------------------------------------------------------------------
def _device_kind():
    try:
        return jax.devices()[0].device_kind.lower()
    except Exception:
        return ""


def _vmem_capacity_bytes():
    try:
        return int(pltpu.get_tpu_info().vmem_capacity_bytes)
    except Exception:
        return 64 * 1024 * 1024          # conservative (v7x per-core VMEM)


def _vmem_plan():
    """(per-tile VMEM budget, vmem_limit_bytes) chosen per chip generation."""
    cap = _vmem_capacity_bytes()
    if cap >= 96 * 1024 * 1024:          # v5e / v6e: 128 MiB physical
        return 28 * 1024 * 1024, 64 * 1024 * 1024
    return 16 * 1024 * 1024, 44 * 1024 * 1024   # v7x: 64 MiB physical


def _sublane_multiple(dtype):
    """Min sublane tile for this dtype: 8 (f32), 16 (bf16), 32 (int8/fp8)."""
    return max(8, 32 // jnp.dtype(dtype).itemsize)


def _round_up(x, m):
    return ((x + m - 1) // m) * m


def _choose_row_tile(batch, d, *, io_rows, tmp_rows, sublane, vmem_budget,
                     min_programs=1):
    """Largest sublane-aligned row tile whose working set fits `vmem_budget`.

    Only the I/O blocks are double-buffered by the BlockSpec pipeline (x2);
    in-kernel f32 temporaries are allocated once.
    """
    bytes_per_row = (2 * io_rows + tmp_rows) * d * 4
    tb = max(sublane, vmem_budget // max(bytes_per_row, 1))
    if min_programs > 1:
        # Keep >= min_programs grid steps so v7x can shard rows over both TCs.
        cap = max(sublane, _round_up(pl.cdiv(batch, min_programs), sublane))
        tb = min(tb, cap)
    if tb >= batch:
        return batch
    return max(sublane, (tb // sublane) * sublane)


# ----------------------------------------------------------------------------
# kernels
# ----------------------------------------------------------------------------
def _train_prng_kernel(seed_ref, logits_ref, out_ref, *, k, tau0, bf16_eup):
    """On-chip-PRNG path: uniform -> Gumbel -> softmax over D -> max over k."""
    # Decorrelate row tiles by folding the grid index into the seed.
    pltpu.prng_seed(seed_ref[0], pl.program_id(0))

    shape = out_ref.shape
    inv_tau0 = jnp.float32(1.0 / tau0)
    scaled_logits = logits_ref[...].astype(jnp.float32) * inv_tau0   # hoisted

    result = jnp.zeros(shape, jnp.float32)            # softmax > 0, so 0-init ok
    for _ in range(k):                                # k is a small static int
        raw = pltpu.prng_random_bits(shape)
        bits = raw if raw.dtype == jnp.uint32 else pltpu.bitcast(raw, jnp.uint32)
        # 23 random mantissa bits -> f32 in [1, 2); shift to uniform [0, 1).
        fbits = (bits >> jnp.uint32(9)) | jnp.uint32(0x3F800000)
        u = pltpu.bitcast(fbits, jnp.float32) - jnp.float32(1.0)
        u = jnp.maximum(u, jnp.float32(1e-10))        # torch clamp_min(1e-10)

        inner = -jnp.log(u)                           # keep f32: bf16 u==1 -> inf
        if bf16_eup:
            # Outer log and exp on the bf16 EUP (v6e/v7x); reductions stay f32.
            gumbel = (-jnp.log(inner.astype(jnp.bfloat16))).astype(jnp.float32)
        else:
            gumbel = -jnp.log(inner)

        noisy = gumbel * inv_tau0 + scaled_logits
        m = jnp.max(noisy, axis=-1, keepdims=True)
        shifted = noisy - m
        if bf16_eup:
            e = jnp.exp(shifted.astype(jnp.bfloat16)).astype(jnp.float32)
        else:
            e = jnp.exp(shifted)
        denom = jnp.sum(e, axis=-1, keepdims=True)
        s = e * pl.reciprocal(denom, approx=True)     # EUP, no divide
        result = jnp.maximum(result, s)

    out_ref[...] = result.astype(out_ref.dtype)


def _train_streamed_kernel(logits_ref, noise_ref, out_ref, *, k, tau0,
                           approx_recip):
    """Portable / verification path: noise streamed in as a (k, TB, D) block."""
    inv_tau0 = jnp.float32(1.0 / tau0)
    scaled_logits = logits_ref[...].astype(jnp.float32) * inv_tau0

    result = None
    for j in range(k):
        u = jnp.maximum(noise_ref[j].astype(jnp.float32), jnp.float32(1e-10))
        gumbel = -jnp.log(-jnp.log(u))
        noisy = gumbel * inv_tau0 + scaled_logits
        m = jnp.max(noisy, axis=-1, keepdims=True)
        e = jnp.exp(noisy - m)
        denom = jnp.sum(e, axis=-1, keepdims=True)
        if approx_recip:
            s = e * pl.reciprocal(denom, approx=True)
        else:
            s = e / denom
        result = s if result is None else jnp.maximum(result, s)

    out_ref[...] = result.astype(out_ref.dtype)


def _eval_kernel(logits_ref, thresh_ref, out_ref):
    """Hard top-k mask given the per-row k-th-largest threshold.

    Note: like the PyTorch reference (`logits >= threshold`), ties at the k-th
    value select more than k features.
    """
    out_ref[...] = (logits_ref[...] >= thresh_ref[...]).astype(out_ref.dtype)


# ----------------------------------------------------------------------------
# module
# ----------------------------------------------------------------------------
class SampleConcrete:
    """Pallas port of the PyTorch SampleConcrete layer."""

    def __init__(self, tau0, k):
        self.tau0 = float(tau0)
        self.k = int(k)

    # -- public API ----------------------------------------------------------
    def __call__(self, logits, rng=None, training=True, use_onchip_prng=None):
        if not training:
            return self._eval(logits)
        if rng is None:
            rng = jax.random.PRNGKey(0)
        if use_onchip_prng is None:
            use_onchip_prng = jax.default_backend() == "tpu"
        if use_onchip_prng:
            return self._train_onchip(logits, rng)
        return self._train_streamed(logits, rng)

    # -- training, on-chip PRNG (TPU fast path) ------------------------------
    def _train_onchip(self, logits, rng):
        B, D = logits.shape
        kind = _device_kind()
        budget, vmem_limit = _vmem_plan()
        sub = _sublane_multiple(logits.dtype)
        two_tc = ("v7" in kind) or ("7x" in kind)
        tb = _choose_row_tile(B, D, io_rows=2, tmp_rows=8, sublane=sub,
                              vmem_budget=budget,
                              min_programs=2 if two_tc else 1)
        grid = (pl.cdiv(B, tb),)
        bf16_eup = any(t in kind for t in ("v6", "v7", "7x"))

        seed = jax.random.randint(rng, (1,), 0, jnp.iinfo(jnp.int32).max,
                                  dtype=jnp.int32)

        kern = functools.partial(_train_prng_kernel, k=self.k, tau0=self.tau0,
                                 bf16_eup=bf16_eup)
        cost = pl.CostEstimate(
            flops=10 * self.k * B * D,
            transcendentals=3 * self.k * B * D,
            bytes_accessed=2 * B * D * 4,          # logits in + samples out
        )
        return pl.pallas_call(
            kern,
            out_shape=jax.ShapeDtypeStruct((B, D), logits.dtype),
            grid_spec=pltpu.PrefetchScalarGridSpec(
                num_scalar_prefetch=1,
                grid=grid,
                in_specs=[pl.BlockSpec((tb, D), lambda i, seed: (i, 0))],
                out_specs=pl.BlockSpec((tb, D), lambda i, seed: (i, 0)),
            ),
            compiler_params=pltpu.CompilerParams(
                dimension_semantics=("parallel",),
                vmem_limit_bytes=vmem_limit,
            ),
            cost_estimate=cost,
        )(seed, logits)

    # -- training, streamed noise (portable / verification path) -------------
    def _train_streamed(self, logits, rng):
        B, D = logits.shape
        kind = _device_kind()
        budget, vmem_limit = _vmem_plan()
        sub = _sublane_multiple(logits.dtype)
        two_tc = ("v7" in kind) or ("7x" in kind)
        tb = _choose_row_tile(B, D, io_rows=2 + self.k, tmp_rows=8, sublane=sub,
                              vmem_budget=budget,
                              min_programs=2 if two_tc else 1)
        grid = (pl.cdiv(B, tb),)

        # Distributionally the same draw as torch.rand((B, k, D)); laid out
        # (k, B, D) so the kernel slices a lane-dense (TB, D) tile per sample.
        noise = jax.random.uniform(rng, (self.k, B, D), dtype=jnp.float32)

        kern = functools.partial(_train_streamed_kernel, k=self.k,
                                 tau0=self.tau0,
                                 approx_recip=(jax.default_backend() == "tpu"))
        cost = pl.CostEstimate(
            flops=10 * self.k * B * D,
            transcendentals=3 * self.k * B * D,
            bytes_accessed=(self.k + 2) * B * D * 4,
        )
        return pl.pallas_call(
            kern,
            out_shape=jax.ShapeDtypeStruct((B, D), logits.dtype),
            grid=grid,
            in_specs=[
                pl.BlockSpec((tb, D), lambda i: (i, 0)),             # logits
                pl.BlockSpec((self.k, tb, D), lambda i: (0, i, 0)),  # noise
            ],
            out_specs=pl.BlockSpec((tb, D), lambda i: (i, 0)),
            compiler_params=pltpu.CompilerParams(
                dimension_semantics=("parallel",),
                vmem_limit_bytes=vmem_limit,
            ),
            cost_estimate=cost,
        )(logits, noise)

    # -- eval ----------------------------------------------------------------
    def _eval(self, logits):
        B, D = logits.shape
        kind = _device_kind()
        budget, vmem_limit = _vmem_plan()
        sub = _sublane_multiple(logits.dtype)
        two_tc = ("v7" in kind) or ("7x" in kind)
        tb = _choose_row_tile(B, D, io_rows=2, tmp_rows=2, sublane=sub,
                              vmem_budget=budget,
                              min_programs=2 if two_tc else 1)
        grid = (pl.cdiv(B, tb),)

        # TODO(synk): top-k has no clean Pallas TPU lowering; the k-th-largest
        # threshold is computed in XLA, the compare/cast runs row-tiled here.
        thresh = lax.top_k(logits, self.k)[0][:, -1:]                # (B, 1)
        return pl.pallas_call(
            _eval_kernel,
            out_shape=jax.ShapeDtypeStruct((B, D), jnp.float32),
            grid=grid,
            in_specs=[
                pl.BlockSpec((tb, D), lambda i: (i, 0)),
                pl.BlockSpec((tb, 1), lambda i: (i, 0)),
            ],
            out_specs=pl.BlockSpec((tb, D), lambda i: (i, 0)),
            compiler_params=pltpu.CompilerParams(
                dimension_semantics=("parallel",),
                vmem_limit_bytes=vmem_limit,
            ),
        )(logits, thresh)


if __name__ == "__main__":
    B, D = 8, 128
    tau0, k = 0.5, 4

    key = jax.random.PRNGKey(0)
    k_logits, k_noise = jax.random.split(key)
    logits = jax.random.normal(k_logits, (B, D), dtype=jnp.float32)

    layer = SampleConcrete(tau0=tau0, k=k)

    # 1) Fast path: on-chip PRNG (statistical checks; no bit-exact reference).
    samples = jax.block_until_ready(layer(logits, rng=k_noise, training=True))
    assert samples.shape == (B, D) and samples.dtype == jnp.float32
    assert bool(jnp.all(jnp.isfinite(samples)))
    assert bool(jnp.all(samples >= 0.0)) and bool(jnp.all(samples <= 1.0 + 1e-2))
    row_sums = jnp.sum(samples, axis=-1)
    # elementwise max over k softmax rows: sum is in [~1, ~k]
    assert bool(jnp.all(row_sums >= 0.98)) and bool(jnp.all(row_sums <= k + 0.1))

    # 2) Streamed-noise path vs pure-JAX reference (identical noise draw).
    samples_s = jax.block_until_ready(
        layer(logits, rng=k_noise, training=True, use_onchip_prng=False))
    noise_ref = jax.random.uniform(k_noise, (k, B, D), dtype=jnp.float32)
    u_ref = jnp.maximum(noise_ref, 1e-10)
    gumbel_ref = -jnp.log(-jnp.log(u_ref))
    ref = jnp.max(jax.nn.softmax((gumbel_ref + logits[None]) / tau0, axis=-1),
                  axis=0)
    assert bool(jnp.allclose(samples_s, ref, atol=1e-2, rtol=1e-2))

    # 3) Eval path (hard top-k mask).
    discrete = jax.block_until_ready(layer(logits, training=False))
    assert discrete.shape == (B, D) and discrete.dtype == jnp.float32
    # each row keeps exactly k features (no ties in random normal logits)
    assert bool(jnp.all(jnp.sum(discrete, axis=-1) == k))

    print("KERNEL_OK")
</pallas_src>

<mosaic_0001>
module attributes {stable_mosaic.version = 11 : i64} {
  func.func @_train_streamed_kernel(%arg0: i32, %arg1: memref<8x128xf32, #tpu.memory_space<vmem>>, %arg2: memref<4x8x128xf32, #tpu.memory_space<vmem>>, %arg3: memref<8x128xf32, #tpu.memory_space<vmem>>) attributes {dimension_semantics = [#tpu.dimension_semantics<parallel>], iteration_bounds = array<i64: 1>, scalar_prefetch = 0 : i64, scratch_operands = 0 : i64, tpu.core_type = #tpu.core_type<tc>, window_params = [{transform_indices = @transform_0, window_bounds = array<i64: 8, 128>}, {transform_indices = @transform_1, window_bounds = array<i64: 4, 8, 128>}, {transform_indices = @transform_2, window_bounds = array<i64: 8, 128>}]} {
    %c0 = arith.constant 0 : index
    %c0_0 = arith.constant 0 : index
    %0 = vector.load %arg1[%c0, %c0_0] : memref<8x128xf32, #tpu.memory_space<vmem>>, vector<8x128xf32>
    %cst = arith.constant 2.000000e+00 : f32
    %1 = vector.broadcast %cst : f32 to vector<8x128xf32>
    %2 = arith.mulf %0, %1 : vector<8x128xf32>
    %c0_1 = arith.constant 0 : index
    %c0_2 = arith.constant 0 : index
    %c0_3 = arith.constant 0 : index
    %3 = vector.load %arg2[%c0_1, %c0_2, %c0_3] : memref<4x8x128xf32, #tpu.memory_space<vmem>>, vector<1x8x128xf32>
    %4 = vector.shape_cast %3 : vector<1x8x128xf32> to vector<8x128xf32>
    %cst_4 = arith.constant 1.000000e-10 : f32
    %5 = vector.broadcast %cst_4 : f32 to vector<8x128xf32>
    %6 = arith.maximumf %4, %5 : vector<8x128xf32>
    %7 = math.log %6 : vector<8x128xf32>
    %cst_5 = arith.constant 0.000000e+00 : f32
    %8 = vector.broadcast %cst_5 : f32 to vector<8x128xf32>
    %9 = arith.subf %8, %7 : vector<8x128xf32>
    %10 = math.log %9 : vector<8x128xf32>
    %cst_6 = arith.constant 0.000000e+00 : f32
    %11 = vector.broadcast %cst_6 : f32 to vector<8x128xf32>
    %12 = arith.subf %11, %10 : vector<8x128xf32>
    %cst_7 = arith.constant 2.000000e+00 : f32
    %13 = vector.broadcast %cst_7 : f32 to vector<8x128xf32>
    %14 = arith.mulf %12, %13 : vector<8x128xf32>
    %15 = arith.addf %14, %2 : vector<8x128xf32>
    %cst_8 = arith.constant dense<0xFF800000> : vector<8xf32>
    %16 = vector.multi_reduction <maximumf>, %15, %cst_8 [1] : vector<8x128xf32> to vector<8xf32>
    %17 = vector.shape_cast %16 : vector<8xf32> to vector<8x1xf32>
    %18 = vector.broadcast %17 : vector<8x1xf32> to vector<8x128xf32>
    %19 = arith.subf %15, %18 : vector<8x128xf32>
    %20 = math.exp %19 : vector<8x128xf32>
    %cst_9 = arith.constant dense<0.000000e+00> : vector<8xf32>
    %21 = vector.multi_reduction <add>, %20, %cst_9 [1] : vector<8x128xf32> to vector<8xf32>
    %22 = vector.shape_cast %21 : vector<8xf32> to vector<8x1xf32>
    %23 = vector.broadcast %22 : vector<8x1xf32> to vector<8x128xf32>
    %24 = arith.divf %20, %23 : vector<8x128xf32>
    %c1 = arith.constant 1 : index
    %c0_10 = arith.constant 0 : index
    %c0_11 = arith.constant 0 : index
    %25 = vector.load %arg2[%c1, %c0_10, %c0_11] : memref<4x8x128xf32, #tpu.memory_space<vmem>>, vector<1x8x128xf32>
    %26 = vector.shape_cast %25 : vector<1x8x128xf32> to vector<8x128xf32>
    %cst_12 = arith.constant 1.000000e-10 : f32
    %27 = vector.broadcast %cst_12 : f32 to vector<8x128xf32>
    %28 = arith.maximumf %26, %27 : vector<8x128xf32>
    %29 = math.log %28 : vector<8x128xf32>
    %cst_13 = arith.constant 0.000000e+00 : f32
    %30 = vector.broadcast %cst_13 : f32 to vector<8x128xf32>
    %31 = arith.subf %30, %29 : vector<8x128xf32>
    %32 = math.log %31 : vector<8x128xf32>
    %cst_14 = arith.constant 0.000000e+00 : f32
    %33 = vector.broadcast %cst_14 : f32 to vector<8x128xf32>
    %34 = arith.subf %33, %32 : vector<8x128xf32>
    %cst_15 = arith.constant 2.000000e+00 : f32
    %35 = vector.broadcast %cst_15 : f32 to vector<8x128xf32>
    %36 = arith.mulf %34, %35 : vector<8x128xf32>
    %37 = arith.addf %36, %2 : vector<8x128xf32>
    %cst_16 = arith.constant dense<0xFF800000> : vector<8xf32>
    %38 = vector.multi_reduction <maximumf>, %37, %cst_16 [1] : vector<8x128xf32> to vector<8xf32>
    %39 = vector.shape_cast %38 : vector<8xf32> to vector<8x1xf32>
    %40 = vector.broadcast %39 : vector<8x1xf32> to vector<8x128xf32>
    %41 = arith.subf %37, %40 : vector<8x128xf32>
    %42 = math.exp %41 : vector<8x128xf32>
    %cst_17 = arith.constant dense<0.000000e+00> : vector<8xf32>
    %43 = vector.multi_reduction <add>, %42, %cst_17 [1] : vector<8x128xf32> to vector<8xf32>
    %44 = vector.shape_cast %43 : vector<8xf32> to vector<8x1xf32>
    %45 = vector.broadcast %44 : vector<8x1xf32> to vector<8x128xf32>
    %46 = arith.divf %42, %45 : vector<8x128xf32>
    %47 = arith.maximumf %24, %46 : vector<8x128xf32>
    %c2 = arith.constant 2 : index
    %c0_18 = arith.constant 0 : index
    %c0_19 = arith.constant 0 : index
    %48 = vector.load %arg2[%c2, %c0_18, %c0_19] : memref<4x8x128xf32, #tpu.memory_space<vmem>>, vector<1x8x128xf32>
    %49 = vector.shape_cast %48 : vector<1x8x128xf32> to vector<8x128xf32>
    %cst_20 = arith.constant 1.000000e-10 : f32
    %50 = vector.broadcast %cst_20 : f32 to vector<8x128xf32>
    %51 = arith.maximumf %49, %50 : vector<8x128xf32>
    %52 = math.log %51 : vector<8x128xf32>
    %cst_21 = arith.constant 0.000000e+00 : f32
    %53 = vector.broadcast %cst_21 : f32 to vector<8x128xf32>
    %54 = arith.subf %53, %52 : vector<8x128xf32>
    %55 = math.log %54 : vector<8x128xf32>
    %cst_22 = arith.constant 0.000000e+00 : f32
    %56 = vector.broadcast %cst_22 : f32 to vector<8x128xf32>
    %57 = arith.subf %56, %55 : vector<8x128xf32>
    %cst_23 = arith.constant 2.000000e+00 : f32
    %58 = vector.broadcast %cst_23 : f32 to vector<8x128xf32>
    %59 = arith.mulf %57, %58 : vector<8x128xf32>
    %60 = arith.addf %59, %2 : vector<8x128xf32>
    %cst_24 = arith.constant dense<0xFF800000> : vector<8xf32>
    %61 = vector.multi_reduction <maximumf>, %60, %cst_24 [1] : vector<8x128xf32> to vector<8xf32>
    %62 = vector.shape_cast %61 : vector<8xf32> to vector<8x1xf32>
    %63 = vector.broadcast %62 : vector<8x1xf32> to vector<8x128xf32>
    %64 = arith.subf %60, %63 : vector<8x128xf32>
    %65 = math.exp %64 : vector<8x128xf32>
    %cst_25 = arith.constant dense<0.000000e+00> : vector<8xf32>
    %66 = vector.multi_reduction <add>, %65, %cst_25 [1] : vector<8x128xf32> to vector<8xf32>
    %67 = vector.shape_cast %66 : vector<8xf32> to vector<8x1xf32>
    %68 = vector.broadcast %67 : vector<8x1xf32> to vector<8x128xf32>
    %69 = arith.divf %65, %68 : vector<8x128xf32>
    %70 = arith.maximumf %47, %69 : vector<8x128xf32>
    %c3 = arith.constant 3 : index
    %c0_26 = arith.constant 0 : index
    %c0_27 = arith.constant 0 : index
    %71 = vector.load %arg2[%c3, %c0_26, %c0_27] : memref<4x8x128xf32, #tpu.memory_space<vmem>>, vector<1x8x128xf32>
    %72 = vector.shape_cast %71 : vector<1x8x128xf32> to vector<8x128xf32>
    %cst_28 = arith.constant 1.000000e-10 : f32
    %73 = vector.broadcast %cst_28 : f32 to vector<8x128xf32>
    %74 = arith.maximumf %72, %73 : vector<8x128xf32>
    %75 = math.log %74 : vector<8x128xf32>
    %cst_29 = arith.constant 0.000000e+00 : f32
    %76 = vector.broadcast %cst_29 : f32 to vector<8x128xf32>
    %77 = arith.subf %76, %75 : vector<8x128xf32>
    %78 = math.log %77 : vector<8x128xf32>
    %cst_30 = arith.constant 0.000000e+00 : f32
    %79 = vector.broadcast %cst_30 : f32 to vector<8x128xf32>
    %80 = arith.subf %79, %78 : vector<8x128xf32>
    %cst_31 = arith.constant 2.000000e+00 : f32
    %81 = vector.broadcast %cst_31 : f32 to vector<8x128xf32>
    %82 = arith.mulf %80, %81 : vector<8x128xf32>
    %83 = arith.addf %82, %2 : vector<8x128xf32>
    %cst_32 = arith.constant dense<0xFF800000> : vector<8xf32>
    %84 = vector.multi_reduction <maximumf>, %83, %cst_32 [1] : vector<8x128xf32> to vector<8xf32>
    %85 = vector.shape_cast %84 : vector<8xf32> to vector<8x1xf32>
    %86 = vector.broadcast %85 : vector<8x1xf32> to vector<8x128xf32>
    %87 = arith.subf %83, %86 : vector<8x128xf32>
    %88 = math.exp %87 : vector<8x128xf32>
    %cst_33 = arith.constant dense<0.000000e+00> : vector<8xf32>
    %89 = vector.multi_reduction <add>, %88, %cst_33 [1] : vector<8x128xf32> to vector<8xf32>
    %90 = vector.shape_cast %89 : vector<8xf32> to vector<8x1xf32>
    %91 = vector.broadcast %90 : vector<8x1xf32> to vector<8x128xf32>
    %92 = arith.divf %88, %91 : vector<8x128xf32>
    %93 = arith.maximumf %70, %92 : vector<8x128xf32>
    %c0_34 = arith.constant 0 : index
    %c0_35 = arith.constant 0 : index
    %94 = vector.load %arg3[%c0_34, %c0_35] : memref<8x128xf32, #tpu.memory_space<vmem>>, vector<8x128xf32>
    tpu.vector_store %arg3[%c0_34, %c0_35], %93 {strides = array<i32>} : memref<8x128xf32, #tpu.memory_space<vmem>>, vector<8x128xf32>,
    return
  }
  func.func @transform_0(%arg0: i32) -> (i32, i32) {
    %c0_i32 = arith.constant 0 : i32
    %c0_i32_0 = arith.constant 0 : i32
    return %arg0, %c0_i32 : i32, i32
  }
  func.func @transform_1(%arg0: i32) -> (i32, i32, i32) {
    %c0_i32 = arith.constant 0 : i32
    %c0_i32_0 = arith.constant 0 : i32
    %c0_i32_1 = arith.constant 0 : i32
    return %c0_i32, %arg0, %c0_i32_0 : i32, i32, i32
  }
  func.func @transform_2(%arg0: i32) -> (i32, i32) {
    %c0_i32 = arith.constant 0 : i32
    %c0_i32_0 = arith.constant 0 : i32
    return %arg0, %c0_i32 : i32, i32
  }
}

</mosaic_0001>

<llo_original>
// kernel: tpu_custom_call.1
$region0: #{tpu_custom_call.1}
  #allocation0 [shape = 'u32[]', space=smem, size = 0x4, offset = 0x4, fixed_abs, tag = 'smem constant byte address 0x4 - core index']
  #allocation1 [shape = 'u32[144,128]{1,0:T(1,128)}', space=vmem, size = 0x12000, scoped, tag = 'internal scratch']
  %s0 = inlined_call_operand.hbm [shape: f32[8,128], index: 0, kind: input, shape index: {}]
  %s1 = inlined_call_operand.hbm [shape: f32[4,8,128], index: 1, kind: input, shape index: {}]
  %s2 = inlined_call_operand.hbm [shape: f32[8,128], index: 2, kind: output, shape index: {}]
  %s3 = sld [smem:[#allocation0]]
  $region26: #{tpu_custom_call.1} parent=0
    _
  %s5 = ssub.s32 1, %s3
  %s6 = scalar_select 0, %s5, %s3
  $region1: #{tpu_custom_call.1} parent=0
    #allocation2 [shape = 'u8[4096]{0}', space=vmem, size = 0x1000, scoped, tag = 'input window, operand 0, single buffered']
    #allocation3 [shape = 's32[1]{0}', space=sflag, size = 0x4, scoped, tag = 'scoped memory for tpu_custom_call.1']
    #allocation4 [shape = 's32[1]{0}', space=sflag, size = 0x4, scoped, tag = 'scoped memory for tpu_custom_call.1']
    #allocation5 [shape = 'u8[16384]{0}', space=vmem, size = 0x4000, scoped, tag = 'input window, operand 1, single buffered']
    #allocation6 [shape = 's32[1]{0}', space=sflag, size = 0x4, scoped, tag = 'scoped memory for tpu_custom_call.1']
    #allocation7 [shape = 'u8[4096]{0}', space=vmem, size = 0x1000, scoped, tag = 'output window, operand 0, single buffered']
    %7 = vsyncpa [#allocation3], 0
    %8 = vsyncpa [#allocation6], 0
    %9 = vsyncpa [#allocation4], 0
    // Predicated region
    $region2: #{tpu_custom_call.1} parent=1 // pred_check
      _
    $region3: #{tpu_custom_call.1} parent=1 // pred_check_branch
      %11 = sbr.rel (0) target = $region5
    $region4: #{tpu_custom_call.1} parent=1 // pred_region
      %s13 = ssub.s32 128, 128
      %14 = vsyncadd [#allocation3], %s13
      %s16 = sshll.u32 [#allocation2], 4
      %s17 = int_to_ptr.vmem [resolvable:$true] %s16
      %19 = dma.hbm_to_vmem [thread:$0]  %s0, 128, %s17, [#allocation3]
    $region5: #{tpu_custom_call.1} parent=1 // pred_fallthru
      _
    // Predicated region
    $region6: #{tpu_custom_call.1} parent=1 // pred_check
      _
    $region7: #{tpu_custom_call.1} parent=1 // pred_check_branch
      %21 = sbr.rel (0) target = $region9
    $region8: #{tpu_custom_call.1} parent=1 // pred_region
      %s23 = ssub.s32 512, 512
      %24 = vsyncadd [#allocation6], %s23
      %s25 = sshll.u32 [#allocation5], 4
      %s26 = int_to_ptr.vmem [resolvable:$true] %s25
      %31 = dma.hbm_to_vmem [thread:$0]  %s1, 512, %s26, [#allocation6], 128, 128, 8
    $region9: #{tpu_custom_call.1} parent=1 // pred_fallthru
      _
    // Predicated region
    $region10: #{tpu_custom_call.1} parent=1 // pred_check
      _
    $region11: #{tpu_custom_call.1} parent=1 // pred_check_branch
      %33 = sbr.rel (0) target = $region13
    $region12: #{tpu_custom_call.1} parent=1 // pred_region
      %34 = dma.done [#allocation3], 128
    $region13: #{tpu_custom_call.1} parent=1 // pred_fallthru
      _
    // Predicated region
    $region14: #{tpu_custom_call.1} parent=1 // pred_check
      _
    $region15: #{tpu_custom_call.1} parent=1 // pred_check_branch
      %36 = sbr.rel (0) target = $region17
    $region16: #{tpu_custom_call.1} parent=1 // pred_region
      %37 = dma.done [#allocation6], 512
    $region17: #{tpu_custom_call.1} parent=1 // pred_fallthru
      _
    %v38 = vld [vmem:[#allocation2] sm:$0xff]
    %v39 = vmul.f32 %v38, 2.0
    %v40 = vld [vmem:[#allocation5] sm:$0xff]
    %v41 = vmax.f32 %v40, 1e-10
    %v42 = vlog2.pop %v41
    %v43 = vmul.f32 %v42, 0.6931472
    %v44 = vsub.f32 0.0, %v43
    %v45 = vlog2.pop %v44
    %v46 = vmul.f32 %v45, 0.6931472
    %v47 = vsub.f32 0.0, %v46
    %v48 = vmul.f32 %v47, 2.0
    %v49 = vadd.f32 %v48, %v39
    %50 = vmax.xlane.f32.xlu0 %v49
    %v51 = vpop.xlane.xlu0 %50
    %v52 = vsub.f32 %v49, %v51
    %v53 = vmul.f32 %v52, 1.442695
    %v54 = vpow.pop %v53
    %55 = vadd.xlane.f32.xlu0 %v54
    %v56 = vpop.xlane.xlu0 %55
    %v57 = vrcp.pop %v56
    %v58 = vmul.f32 %v54, %v57
    %s59 = scalar_lea.vmem [#allocation5], 8
    %v60 = vld [vmem:[%s59] sm:$0xff]
    %v61 = vmax.f32 %v60, 1e-10
    %v62 = vlog2.pop %v61
    %v63 = vmul.f32 %v62, 0.6931472
    %v64 = vsub.f32 0.0, %v63
    %v65 = vlog2.pop %v64
    %v66 = vmul.f32 %v65, 0.6931472
    %v67 = vsub.f32 0.0, %v66
    %v68 = vmul.f32 %v67, 2.0
    %v69 = vadd.f32 %v68, %v39
    %70 = vmax.xlane.f32.xlu0 %v69
    %v71 = vpop.xlane.xlu0 %70
    %v72 = vsub.f32 %v69, %v71
    %v73 = vmul.f32 %v72, 1.442695
    %v74 = vpow.pop %v73
    %75 = vadd.xlane.f32.xlu0 %v74
    %v76 = vpop.xlane.xlu0 %75
    %v77 = vrcp.pop %v76
    %v78 = vmul.f32 %v74, %v77
    %v79 = vmax.f32 %v58, %v78
    %s80 = scalar_lea.vmem [#allocation5], 16
    %v81 = vld [vmem:[%s80] sm:$0xff]
    %v82 = vmax.f32 %v81, 1e-10
    %v83 = vlog2.pop %v82
    %v84 = vmul.f32 %v83, 0.6931472
    %v85 = vsub.f32 0.0, %v84
    %v86 = vlog2.pop %v85
    %v87 = vmul.f32 %v86, 0.6931472
    %v88 = vsub.f32 0.0, %v87
    %v89 = vmul.f32 %v88, 2.0
    %v90 = vadd.f32 %v89, %v39
    %91 = vmax.xlane.f32.xlu0 %v90
    %v92 = vpop.xlane.xlu0 %91
    %v93 = vsub.f32 %v90, %v92
    %v94 = vmul.f32 %v93, 1.442695
    %v95 = vpow.pop %v94
    %96 = vadd.xlane.f32.xlu0 %v95
    %v97 = vpop.xlane.xlu0 %96
    %v98 = vrcp.pop %v97
    %v99 = vmul.f32 %v95, %v98
    %v100 = vmax.f32 %v79, %v99
    %s101 = scalar_lea.vmem [#allocation5], 24
    %v102 = vld [vmem:[%s101] sm:$0xff]
    %v103 = vmax.f32 %v102, 1e-10
    %v104 = vlog2.pop %v103
    %v105 = vmul.f32 %v104, 0.6931472
    %v106 = vsub.f32 0.0, %v105
    %v107 = vlog2.pop %v106
    %v108 = vmul.f32 %v107, 0.6931472
    %v109 = vsub.f32 0.0, %v108
    %v110 = vmul.f32 %v109, 2.0
    %v111 = vadd.f32 %v110, %v39
    %112 = vmax.xlane.f32.xlu0 %v111
    %v113 = vpop.xlane.xlu0 %112
    %v114 = vsub.f32 %v111, %v113
    %v115 = vmul.f32 %v114, 1.442695
    %v116 = vpow.pop %v115
    %117 = vadd.xlane.f32.xlu0 %v116
    %v118 = vpop.xlane.xlu0 %117
    %v119 = vrcp.pop %v118
    %v120 = vmul.f32 %v116, %v119
    %v121 = vmax.f32 %v100, %v120
    %122 = vst [vmem:[#allocation7] sm:$0xff] %v121
    // Predicated region
    $region18: #{tpu_custom_call.1} parent=1 // pred_check
      _
    $region19: #{tpu_custom_call.1} parent=1 // pred_check_branch
      %124 = sbr.rel (0) target = $region21
    $region20: #{tpu_custom_call.1} parent=1 // pred_region
      %s126 = ssub.s32 128, 128
      %127 = vsyncadd [#allocation4], %s126
      %s129 = sshll.u32 [#allocation7], 4
      %s130 = int_to_ptr.vmem [resolvable:$true] %s129
      %132 = dma.vmem_to_hbm [thread:$0]  %s130, 128, %s2, [#allocation4]
    $region21: #{tpu_custom_call.1} parent=1 // pred_fallthru
      _
    // Predicated region
    $region22: #{tpu_custom_call.1} parent=1 // pred_check
      _
    $region23: #{tpu_custom_call.1} parent=1 // pred_check_branch
      %134 = sbr.rel (0) target = $region25
    $region24: #{tpu_custom_call.1} parent=1 // pred_region
      %135 = dma.done [#allocation4], 128
    $region25: #{tpu_custom_call.1} parent=1 // pred_fallthru
      _
    %136 = vsyncpa [#allocation3], 1
    %137 = vsyncpa [#allocation6], 1
    %138 = vsyncpa [#allocation4], 1

</llo_original>
